<compile_context>
chip_gen: v7x
topology: tpu7x:2x2x1
jax: 0.10.0
libtpu: 0.0.40
codegen_flags: <defaults>
</compile_context>

<pallas_src>
import jax
import jax.numpy as jnp
from jax.experimental import pallas as pl
from jax.experimental.pallas import tpu as pltpu


# ---------------------------------------------------------------------------
# Small helpers
# ---------------------------------------------------------------------------
def _round_up(x: int, m: int) -> int:
    return (x + m - 1) // m * m


def _vmem_capacity_bytes() -> int:
    try:
        return int(pltpu.get_tpu_info().vmem_capacity_bytes)
    except Exception:
        # Conservative fallback that is safe on every generation (v7x = 64 MiB).
        return 64 * 1024 * 1024


def _pick_block(m, per_row_bytes, resident_bytes, cap, *, align=8, max_rows=2048):
    """Pick a row-block size and VMEM limit for a row-tiled, pipelined kernel.

    Sizing rules (from the perf review):
      * biggest block that keeps double-buffered in/out tiles + resident
        weights inside ~3/4 of the chip's VMEM capacity,
      * >=4 grid steps when there is enough work (>=2 per v7x TensorCore so
        the pipeline can overlap DMA with compute on both cores),
      * prefer an exact divisor of m (no ragged final block, no padding).
    """
    vmem_limit = (3 * cap) // 4
    budget = max(vmem_limit - 2 * resident_bytes - (2 << 20), 1 << 20)
    bm = max(1, budget // (2 * per_row_bytes))          # double-buffered tiles
    bm = min(bm, max_rows, m)
    if m >= 32:
        bm = min(bm, -(-m // 4))
    elif m >= 16:
        bm = min(bm, -(-m // 2))
    if bm >= m:
        return m, vmem_limit
    best = 0
    for d in range(1, bm + 1):
        if m % d == 0 and (d % align == 0 or d == m):
            best = d
    if best >= max(1, bm // 2):
        return best, vmem_limit
    if align > 1:
        bm = max(align, (bm // align) * align)
    return bm, vmem_limit


# ---------------------------------------------------------------------------
# Glue: pooling / interpolation matrices (f32, built in plain JAX)
# ---------------------------------------------------------------------------
def _adaptive_avg_pool_matrix(out_size: int, in_size: int) -> jnp.ndarray:
    """Row i averages input indices [floor(i*in/out), ceil((i+1)*in/out))."""
    i = jnp.arange(out_size, dtype=jnp.int32)
    start = (i * in_size) // out_size
    end = ((i + 1) * in_size + out_size - 1) // out_size
    j = jnp.arange(in_size, dtype=jnp.int32)
    mask = (j[None, :] >= start[:, None]) & (j[None, :] < end[:, None])
    w = mask.astype(jnp.float32)
    return w / w.sum(axis=1, keepdims=True)


def _bilinear_matrix(out_size: int, in_size: int) -> jnp.ndarray:
    """align_corners=True linear interpolation matrix (out_size, in_size)."""
    if out_size == 1:
        src = jnp.zeros((1,), jnp.float32)
    else:
        src = jnp.arange(out_size, dtype=jnp.float32) * (in_size - 1) / (out_size - 1)
    lo = jnp.clip(jnp.floor(src).astype(jnp.int32), 0, in_size - 1)
    hi = jnp.clip(lo + 1, 0, in_size - 1)
    frac = src - lo.astype(jnp.float32)
    oh_lo = jax.nn.one_hot(lo, in_size, dtype=jnp.float32)
    oh_hi = jax.nn.one_hot(hi, in_size, dtype=jnp.float32)
    return (1.0 - frac)[:, None] * oh_lo + frac[:, None] * oh_hi


def _cubic_conv1(x, a):  # |x| <= 1
    return ((a + 2.0) * x - (a + 3.0)) * x * x + 1.0


def _cubic_conv2(x, a):  # 1 < |x| <= 2
    return (((x - 5.0) * x + 8.0) * x - 4.0) * a


def _bicubic_matrix(out_size: int, in_size: int) -> jnp.ndarray:
    """align_corners=True bicubic (a=-0.75, clamped borders, PyTorch-style)."""
    a = -0.75
    if out_size == 1:
        src = jnp.zeros((1,), jnp.float32)
    else:
        src = jnp.arange(out_size, dtype=jnp.float32) * (in_size - 1) / (out_size - 1)
    i0f = jnp.floor(src)
    t = src - i0f
    i0 = i0f.astype(jnp.int32)
    coeffs = (
        _cubic_conv2(t + 1.0, a),
        _cubic_conv1(t, a),
        _cubic_conv1(1.0 - t, a),
        _cubic_conv2(2.0 - t, a),
    )
    w = jnp.zeros((out_size, in_size), jnp.float32)
    for k, ck in enumerate(coeffs):
        idx = jnp.clip(i0 + (k - 1), 0, in_size - 1)
        w = w + ck[:, None] * jax.nn.one_hot(idx, in_size, dtype=jnp.float32)
    return w


# ---------------------------------------------------------------------------
# Path A: small spatial -> one fused kron matmul
# ---------------------------------------------------------------------------
def _kron_matmul_kernel(x_ref, wt_ref, o_ref):
    # x_ref: (bm, Hi*Wi); wt_ref: (Hi*Wi, Ho*Wo) f32 VMEM-resident.
    o_ref[...] = jnp.dot(
        x_ref[...].astype(jnp.float32), wt_ref[...],
        preferred_element_type=jnp.float32,
    ).astype(o_ref.dtype)


def _resize_kron(x, wh, ww, cap):
    n, c, h_in, w_in = x.shape
    h_out, w_out = wh.shape[0], ww.shape[0]
    m, k, nout = n * c, h_in * w_in, h_out * w_out

    wt = jnp.kron(wh, ww).T.astype(jnp.float32)     # (Hi*Wi, Ho*Wo), kept f32
    x2 = x.reshape(m, k)                            # free (contiguous)

    isz = jnp.dtype(x.dtype).itemsize
    per_row = (_round_up(k, 128) + _round_up(nout, 128)) * isz
    resident = _round_up(k, 8) * _round_up(nout, 128) * 4
    bm, vmem_limit = _pick_block(m, per_row, resident, cap, align=8, max_rows=2048)

    cost = pl.CostEstimate(
        flops=2 * m * k * nout,
        transcendentals=0,
        bytes_accessed=m * (k + nout) * isz + k * nout * 4,
    )
    y2 = pl.pallas_call(
        _kron_matmul_kernel,
        out_shape=jax.ShapeDtypeStruct((m, nout), x.dtype),
        grid_spec=pltpu.PrefetchScalarGridSpec(
            num_scalar_prefetch=0,
            grid=(pl.cdiv(m, bm),),
            in_specs=[
                pl.BlockSpec((bm, k), lambda i: (i, 0)),
                pl.BlockSpec((k, nout), lambda i: (0, 0)),   # VMEM-resident weight
            ],
            out_specs=pl.BlockSpec((bm, nout), lambda i: (i, 0)),
        ),
        compiler_params=pltpu.CompilerParams(
            dimension_semantics=("parallel",),
            vmem_limit_bytes=int(vmem_limit),
        ),
        cost_estimate=cost,
    )(x2, wt)
    return y2.reshape(n, c, h_out, w_out)           # free (contiguous)


# ---------------------------------------------------------------------------
# Path B: larger spatial -> fused separable resize in a single pallas_call
# ---------------------------------------------------------------------------
def _separable_kernel(x_ref, wh_ref, wwt_ref, o_ref):
    # x_ref:  (bc, Hi, Wi)   input channel block
    # wh_ref: (Ho, Hi) f32   VMEM-resident H interpolation matrix
    # wwt_ref:(Wi, Wo) f32   VMEM-resident W interpolation matrix (transposed)
    # o_ref:  (bc, Ho, Wo)   output channel block
    bc = x_ref.shape[0]
    wh = wh_ref[...]
    wwt = wwt_ref[...]

    def one_channel(b):
        xb = x_ref[b].astype(jnp.float32)                            # (Hi, Wi)
        t = jnp.dot(xb, wwt, preferred_element_type=jnp.float32)     # (Hi, Wo)
        yb = jnp.dot(wh, t, preferred_element_type=jnp.float32)      # (Ho, Wo)
        o_ref[b] = yb.astype(o_ref.dtype)

    if bc <= 16:
        for b in range(bc):          # static indices, fully unrolled
            one_channel(b)
    else:
        def body(b, carry):
            one_channel(b)
            return carry
        jax.lax.fori_loop(0, bc, body, 0)


def _resize_separable(x, wh, ww, cap):
    n, c, h_in, w_in = x.shape
    h_out, w_out = wh.shape[0], ww.shape[0]
    m = n * c

    x3 = x.reshape(m, h_in, w_in)                   # free (contiguous)
    whf = wh.astype(jnp.float32)
    wwt = ww.T.astype(jnp.float32)

    isz = jnp.dtype(x.dtype).itemsize
    per_chan = (_round_up(h_in, 8) * _round_up(w_in, 128)
                + _round_up(h_out, 8) * _round_up(w_out, 128)) * isz
    resident = (_round_up(h_out, 8) * _round_up(h_in, 128)
                + _round_up(w_in, 8) * _round_up(w_out, 128)) * 4
    bc, vmem_limit = _pick_block(m, per_chan, resident, cap, align=1, max_rows=64)

    cost = pl.CostEstimate(
        flops=2 * m * (h_in * w_in * w_out + h_in * w_out * h_out),
        transcendentals=0,
        bytes_accessed=m * (h_in * w_in + h_out * w_out) * isz
        + (h_out * h_in + w_in * w_out) * 4,
    )
    y3 = pl.pallas_call(
        _separable_kernel,
        out_shape=jax.ShapeDtypeStruct((m, h_out, w_out), x.dtype),
        grid_spec=pltpu.PrefetchScalarGridSpec(
            num_scalar_prefetch=0,
            grid=(pl.cdiv(m, bc),),
            in_specs=[
                pl.BlockSpec((bc, h_in, w_in), lambda i: (i, 0, 0)),
                pl.BlockSpec((h_out, h_in), lambda i: (0, 0)),    # resident
                pl.BlockSpec((w_in, w_out), lambda i: (0, 0)),    # resident
            ],
            out_specs=pl.BlockSpec((bc, h_out, w_out), lambda i: (i, 0, 0)),
        ),
        compiler_params=pltpu.CompilerParams(
            dimension_semantics=("parallel",),
            vmem_limit_bytes=int(vmem_limit),
        ),
        cost_estimate=cost,
    )(x3, whf, wwt)
    return y3.reshape(n, c, h_out, w_out)           # free (contiguous)


# ---------------------------------------------------------------------------
# Module-equivalent wrapper
# ---------------------------------------------------------------------------
class AdaptiveUpsample:
    valid_upsample = ['UpsampleBilinear', 'UpsampleBicubic', 'AdaptiveAvgPool2d',
                      'ConvTranspose2d', 'PixelShuffle_ICNR']

    def __init__(self, upsample_mode='AdaptiveAvgPool2d'):
        assert upsample_mode in self.valid_upsample, (
            f'`upsample_mode` should be in {self.valid_upsample}, '
            f'received {upsample_mode}')
        self.upsample_mode = upsample_mode

    def __call__(self, x, out_size):
        if self.upsample_mode in ('ConvTranspose2d', 'PixelShuffle_ICNR'):
            # Passthrough in the reference forward().
            return x
        h_out, w_out = (tuple(out_size) if isinstance(out_size, (tuple, list))
                        else (out_size, out_size))
        _, _, h_in, w_in = x.shape
        if self.upsample_mode == 'AdaptiveAvgPool2d':
            mat = _adaptive_avg_pool_matrix
        elif self.upsample_mode == 'UpsampleBilinear':
            mat = _bilinear_matrix
        else:  # 'UpsampleBicubic'
            mat = _bicubic_matrix
        wh = mat(h_out, h_in)
        ww = mat(w_out, w_in)

        cap = _vmem_capacity_bytes()
        kron_bytes = (h_in * w_in) * (h_out * w_out) * 4
        # Single fused matmul while the kron weight is small (keeps the flop
        # blow-up of the non-separable form negligible and the resident weight
        # well inside VMEM on every generation, incl. v7x's 64 MiB).
        if h_in * w_in <= 1024 and kron_bytes <= min(8 << 20, cap // 12):
            return _resize_kron(x, wh, ww, cap)
        return _resize_separable(x, wh, ww, cap)

    def __repr__(self):
        return f"{self.__class__.__name__}(upsample_mode='{self.upsample_mode}')"


if __name__ == "__main__":
    key = jax.random.PRNGKey(0)
    k0, k1 = jax.random.split(key)
    N, C, H, W = 2, 4, 16, 16
    x = jax.random.normal(k0, (N, C, H, W), dtype=jnp.float32)

    # --- AdaptiveAvgPool2d (default), 16x16 -> 8x8 (fused kron matmul path) --
    y = AdaptiveUpsample('AdaptiveAvgPool2d')(x, (8, 8))
    jax.block_until_ready(y)
    y_ref = x.reshape(N, C, 8, 2, 8, 2).mean(axis=(3, 5))
    assert y.shape == (N, C, 8, 8)
    assert jnp.allclose(y, y_ref, atol=1e-5, rtol=1e-5)

    # --- Bilinear (align_corners=True), 16x16 -> 20x20 (kron path) ----------
    y2 = AdaptiveUpsample('UpsampleBilinear')(x, (20, 20))
    jax.block_until_ready(y2)
    wh = _bilinear_matrix(20, H)
    ww = _bilinear_matrix(20, W)
    y2_ref = jnp.einsum('oh,nchw,pw->ncop', wh, x, ww)
    assert y2.shape == (N, C, 20, 20)
    assert jnp.allclose(y2, y2_ref, atol=1e-4, rtol=1e-4)

    # --- Bicubic (align_corners=True): constant-preserving sanity check -----
    y3 = AdaptiveUpsample('UpsampleBicubic')(jnp.ones((N, C, H, W), jnp.float32),
                                             (24, 24))
    jax.block_until_ready(y3)
    assert y3.shape == (N, C, 24, 24)
    assert jnp.allclose(y3, 1.0, atol=1e-4)

    # --- Larger non-square spatial: fused separable single-kernel path ------
    x_big = jax.random.normal(k1, (1, 2, 40, 48), dtype=jnp.float32)
    y4 = AdaptiveUpsample('UpsampleBilinear')(x_big, (56, 72))
    jax.block_until_ready(y4)
    wh_b = _bilinear_matrix(56, 40)
    ww_b = _bilinear_matrix(72, 48)
    y4_ref = jnp.einsum('oh,nchw,pw->ncop', wh_b, x_big, ww_b)
    assert y4.shape == (1, 2, 56, 72)
    assert jnp.allclose(y4, y4_ref, atol=1e-4, rtol=1e-4)

    # --- Many channels: exercises the in-kernel fori_loop branch + grid >= 4
    x_mc = jax.random.normal(k1, (2, 40, 40, 48), dtype=jnp.float32)
    y6 = AdaptiveUpsample('AdaptiveAvgPool2d')(x_mc, (20, 24))
    jax.block_until_ready(y6)
    y6_ref = x_mc.reshape(2, 40, 20, 2, 24, 2).mean(axis=(3, 5))
    assert y6.shape == (2, 40, 20, 24)
    assert jnp.allclose(y6, y6_ref, atol=1e-5, rtol=1e-5)

    # --- Passthrough modes ---------------------------------------------------
    y5 = AdaptiveUpsample('ConvTranspose2d')(x, (8, 8))
    assert jnp.allclose(y5, x)

    print("KERNEL_OK")
</pallas_src>

<mosaic_0001>
module attributes {stable_mosaic.version = 11 : i64} {
  func.func @_kron_matmul_kernel(%arg0: i32, %arg1: memref<8x256xf32, #tpu.memory_space<vmem>>, %arg2: memref<256x64xf32, #tpu.memory_space<vmem>>, %arg3: memref<8x64xf32, #tpu.memory_space<vmem>>) attributes {dimension_semantics = [#tpu.dimension_semantics<parallel>], iteration_bounds = array<i64: 1>, scalar_prefetch = 0 : i64, scratch_operands = 0 : i64, tpu.core_type = #tpu.core_type<tc>, window_params = [{transform_indices = @transform_0, window_bounds = array<i64: 8, 256>}, {pipeline_mode = #tpu.pipeline_mode<synchronous>, transform_indices = @transform_1, window_bounds = array<i64: 256, 64>}, {transform_indices = @transform_2, window_bounds = array<i64: 8, 64>}]} {
    %c0 = arith.constant 0 : index
    %c0_0 = arith.constant 0 : index
    %0 = vector.load %arg1[%c0, %c0_0] : memref<8x256xf32, #tpu.memory_space<vmem>>, vector<8x256xf32>
    %c0_1 = arith.constant 0 : index
    %c0_2 = arith.constant 0 : index
    %1 = vector.load %arg2[%c0_1, %c0_2] : memref<256x64xf32, #tpu.memory_space<vmem>>, vector<256x64xf32>
    %cst = arith.constant dense<0.000000e+00> : vector<8x64xf32>
    %2 = tpu.matmul %0, %1, %cst {dimension_numbers = #tpu.dot_dimension_numbers<[1], [0], [0], [1], [0, 0, 1, 1], [], []>} : vector<8x256xf32>, vector<256x64xf32>, vector<8x64xf32> -> vector<8x64xf32>
    %c0_3 = arith.constant 0 : index
    %c0_4 = arith.constant 0 : index
    %3 = vector.load %arg3[%c0_3, %c0_4] : memref<8x64xf32, #tpu.memory_space<vmem>>, vector<8x64xf32>
    tpu.vector_store %arg3[%c0_3, %c0_4], %2 {strides = array<i32>} : memref<8x64xf32, #tpu.memory_space<vmem>>, vector<8x64xf32>,
    return
  }
  func.func @transform_0(%arg0: i32) -> (i32, i32) {
    %c0_i32 = arith.constant 0 : i32
    %c0_i32_0 = arith.constant 0 : i32
    return %arg0, %c0_i32 : i32, i32
  }
  func.func @transform_1(%arg0: i32) -> (i32, i32) {
    %c0_i32 = arith.constant 0 : i32
    %c0_i32_0 = arith.constant 0 : i32
    %c0_i32_1 = arith.constant 0 : i32
    return %c0_i32, %c0_i32_0 : i32, i32
  }
  func.func @transform_2(%arg0: i32) -> (i32, i32) {
    %c0_i32 = arith.constant 0 : i32
    %c0_i32_0 = arith.constant 0 : i32
    return %arg0, %c0_i32 : i32, i32
  }
}

</mosaic_0001>

<llo_original>
// kernel: tpu_custom_call.1
$region0: #{tpu_custom_call.1}
  #allocation0 [shape = 'u32[]', space=smem, size = 0x4, offset = 0x4, fixed_abs, tag = 'smem constant byte address 0x4 - core index']
  #allocation1 [shape = 'u32[144,128]{1,0:T(1,128)}', space=vmem, size = 0x12000, scoped, tag = 'internal scratch']
  %s0 = inlined_call_operand.vmem [shape: f32[8,256], index: 0, kind: input, shape index: {}]
  %s1 = inlined_call_operand.vmem [shape: f32[256,64], index: 1, kind: input, shape index: {}]
  %s2 = inlined_call_operand.hbm [shape: f32[8,64], index: 2, kind: output, shape index: {}]
  %s3 = sld [smem:[#allocation0]]
  $region18: #{tpu_custom_call.1} parent=0
    _
  %s5 = ssub.s32 1, %s3
  %s6 = scalar_select 0, %s5, %s3
  $region1: #{tpu_custom_call.1} parent=0
    #allocation2 [shape = 'u8[4096]{0}', space=vmem, size = 0x1000, scoped, tag = 'output window, operand 0, single buffered']
    #allocation3 [shape = 's32[1]{0}', space=sflag, size = 0x4, scoped, tag = 'scoped memory for tpu_custom_call.1']
    %7 = vsyncpa [#allocation3], 0
    // Predicated region
    $region2: #{tpu_custom_call.1} parent=1 // pred_check
      _
    $region3: #{tpu_custom_call.1} parent=1 // pred_check_branch
      %9 = sbr.rel (0) target = $region5
    $region4: #{tpu_custom_call.1} parent=1 // pred_region
      _
    $region5: #{tpu_custom_call.1} parent=1 // pred_fallthru
      _
    // Predicated region
    $region6: #{tpu_custom_call.1} parent=1 // pred_check
      _
    $region7: #{tpu_custom_call.1} parent=1 // pred_check_branch
      %11 = sbr.rel (0) target = $region9
    $region8: #{tpu_custom_call.1} parent=1 // pred_region
      _
    $region9: #{tpu_custom_call.1} parent=1 // pred_fallthru
      _
    %v12 = vld [vmem:[%s0] sm:$0xff]
    %v13 = vld [vmem:[%s0 + $0x8] sm:$0xff]
    %v14 = vld [vmem:[%s1] sm:$0xff]
    %v15 = vld [vmem:[%s1 + $0x8] sm:$0xff]
    %v16 = vld [vmem:[%s1 + $0x10] sm:$0xff]
    %v17 = vld [vmem:[%s1 + $0x18] sm:$0xff]
    %v18 = vld [vmem:[%s1 + $0x20] sm:$0xff]
    %v19 = vld [vmem:[%s1 + $0x28] sm:$0xff]
    %v20 = vld [vmem:[%s1 + $0x30] sm:$0xff]
    %v21 = vld [vmem:[%s1 + $0x38] sm:$0xff]
    %v22 = vld [vmem:[%s1 + $0x40] sm:$0xff]
    %v23 = vld [vmem:[%s1 + $0x48] sm:$0xff]
    %v24 = vld [vmem:[%s1 + $0x50] sm:$0xff]
    %v25 = vld [vmem:[%s1 + $0x58] sm:$0xff]
    %v26 = vld [vmem:[%s1 + $0x60] sm:$0xff]
    %v27 = vld [vmem:[%s1 + $0x68] sm:$0xff]
    %v28 = vld [vmem:[%s1 + $0x70] sm:$0xff]
    %v29 = vld [vmem:[%s1 + $0x78] sm:$0xff]
    %v30 = vld [vmem:[%s1 + $0x80] sm:$0xff]
    %v31 = vld [vmem:[%s1 + $0x88] sm:$0xff]
    %v32 = vld [vmem:[%s1 + $0x90] sm:$0xff]
    %v33 = vld [vmem:[%s1 + $0x98] sm:$0xff]
    %v34 = vld [vmem:[%s1 + $0xa0] sm:$0xff]
    %v35 = vld [vmem:[%s1 + $0xa8] sm:$0xff]
    %v36 = vld [vmem:[%s1 + $0xb0] sm:$0xff]
    %v37 = vld [vmem:[%s1 + $0xb8] sm:$0xff]
    %v38 = vld [vmem:[%s1 + $0xc0] sm:$0xff]
    %v39 = vld [vmem:[%s1 + $0xc8] sm:$0xff]
    %v40 = vld [vmem:[%s1 + $0xd0] sm:$0xff]
    %v41 = vld [vmem:[%s1 + $0xd8] sm:$0xff]
    %v42 = vld [vmem:[%s1 + $0xe0] sm:$0xff]
    %v43 = vld [vmem:[%s1 + $0xe8] sm:$0xff]
    %v44 = vld [vmem:[%s1 + $0xf0] sm:$0xff]
    %v45 = vld [vmem:[%s1 + $0xf8] sm:$0xff]
    %46 = vmatprep.subr.mxu0 0.0
    %47 = vmatpush1.msra.mxu0 %v14
    %48 = vmatprep.subr.mxu0 0.0
    %49 = vmatpush1.msra.mxu0 %v15
    %50 = vmatprep.subr.mxu0 0.0
    %51 = vmatpush1.msra.mxu0 %v16
    %52 = vmatprep.subr.mxu0 0.0
    %53 = vmatpush1.msra.mxu0 %v17
    %54 = vmatprep.subr.mxu0 0.0
    %55 = vmatpush1.msra.mxu0 %v18
    %56 = vmatprep.subr.mxu0 0.0
    %57 = vmatpush1.msra.mxu0 %v19
    %58 = vmatprep.subr.mxu0 0.0
    %59 = vmatpush1.msra.mxu0 %v20
    %60 = vmatprep.subr.mxu0 0.0
    %61 = vmatpush1.msra.mxu0 %v21
    %62 = vmatprep.subr.mxu0 0.0
    %63 = vmatpush1.msra.mxu0 %v22
    %64 = vmatprep.subr.mxu0 0.0
    %65 = vmatpush1.msra.mxu0 %v23
    %66 = vmatprep.subr.mxu0 0.0
    %67 = vmatpush1.msra.mxu0 %v24
    %68 = vmatprep.subr.mxu0 0.0
    %69 = vmatpush1.msra.mxu0 %v25
    %70 = vmatprep.subr.mxu0 0.0
    %71 = vmatpush1.msra.mxu0 %v26
    %72 = vmatprep.subr.mxu0 0.0
    %73 = vmatpush1.msra.mxu0 %v27
    %74 = vmatprep.subr.mxu0 0.0
    %75 = vmatpush1.msra.mxu0 %v28
    %76 = vmatprep.subr.mxu0 0.0
    %77 = vmatpush1.msra.mxu0 %v29
    %78 = vmatprep.subr.mxu0 0.0
    %79 = vmatpush1.msra.mxu0 %v30
    %80 = vmatprep.subr.mxu0 0.0
    %81 = vmatpush1.msra.mxu0 %v31
    %82 = vmatprep.subr.mxu0 0.0
    %83 = vmatpush1.msra.mxu0 %v32
    %84 = vmatprep.subr.mxu0 0.0
    %85 = vmatpush1.msra.mxu0 %v33
    %86 = vmatprep.subr.mxu0 0.0
    %87 = vmatpush1.msra.mxu0 %v34
    %88 = vmatprep.subr.mxu0 0.0
    %89 = vmatpush1.msra.mxu0 %v35
    %90 = vmatprep.subr.mxu0 0.0
    %91 = vmatpush1.msra.mxu0 %v36
    %92 = vmatprep.subr.mxu0 0.0
    %93 = vmatpush1.msra.mxu0 %v37
    %94 = vmatprep.subr.mxu0 0.0
    %95 = vmatpush1.msra.mxu0 %v38
    %96 = vmatprep.subr.mxu0 0.0
    %97 = vmatpush1.msra.mxu0 %v39
    %98 = vmatprep.subr.mxu0 0.0
    %99 = vmatpush1.msra.mxu0 %v40
    %100 = vmatprep.subr.mxu0 0.0
    %101 = vmatpush1.msra.mxu0 %v41
    %102 = vmatprep.subr.mxu0 0.0
    %103 = vmatpush1.msra.mxu0 %v42
    %104 = vmatprep.subr.mxu0 0.0
    %105 = vmatpush1.msra.mxu0 %v43
    %106 = vmatprep.subr.mxu0 0.0
    %107 = vmatpush1.msra.mxu0 %v44
    %108 = vmatprep.subr.mxu0 0.0
    %109 = vmatpush1.msra.mxu0 %v45
    %110 = vmatprep.mubr.f32.mxu0 %v13
    %111 = vmatmul.mubr.f32.gmra.mrb[0].mxu0 %v12
    %v112 = vpop.f32.mrb[0].mxu0
    %v113 = vadd.f32 0.0, %v112
    %v114 = vpop.f32.mrb[0].mxu0
    %115 = vdwg.mxu0
    %vm116 = vcmask 523264
    %117 = vst.msk [vmem:[#allocation2] sm:$0xff] %vm116, %v113
    // Predicated region
    $region10: #{tpu_custom_call.1} parent=1 // pred_check
      _
    $region11: #{tpu_custom_call.1} parent=1 // pred_check_branch
      %119 = sbr.rel (0) target = $region13
    $region12: #{tpu_custom_call.1} parent=1 // pred_region
      %s121 = ssub.s32 128, 128
      %122 = vsyncadd [#allocation3], %s121
      %s124 = sshll.u32 [#allocation2], 4
      %s125 = int_to_ptr.vmem [resolvable:$true] %s124
      %127 = dma.vmem_to_hbm [thread:$0]  %s125, 128, %s2, [#allocation3]
    $region13: #{tpu_custom_call.1} parent=1 // pred_fallthru
      _
    // Predicated region
    $region14: #{tpu_custom_call.1} parent=1 // pred_check
      _
    $region15: #{tpu_custom_call.1} parent=1 // pred_check_branch
      %129 = sbr.rel (0) target = $region17
    $region16: #{tpu_custom_call.1} parent=1 // pred_region
      %130 = dma.done [#allocation3], 128
    $region17: #{tpu_custom_call.1} parent=1 // pred_fallthru
      _
    %131 = vsyncpa [#allocation3], 1

</llo_original>
